<compile_context>
chip_gen: v6e
topology: v6e:2x2x1
jax: 0.10.0
libtpu: 0.0.40
codegen_flags: <defaults>
</compile_context>

<pallas_src>
import math

import jax
import jax.numpy as jnp
from jax import lax
from jax.experimental import pallas as pl
from jax.experimental.pallas import tpu as pltpu


def _head_flash_kernel(qidx_ref, kidx_ref, q_ref, k_ref, v_ref, o_ref,
                       m_scr, l_scr, acc_scr):
    # qidx_ref / kidx_ref: (n_pairs,) int32 in SMEM (scalar-prefetched schedule).
    # q_ref:  (tq, H)  pre-projected, pre-scaled query tile.
    # k_ref, v_ref: (tk, H) pre-projected key / value tiles.
    # o_ref:  (H, tq)  lane-dense (transposed) output slab.
    t = pl.program_id(1)
    qi = qidx_ref[t]
    ki = kidx_ref[t]

    @pl.when(ki == 0)
    def _init():
        m_scr[...] = jnp.full(m_scr.shape, -jnp.inf, dtype=jnp.float32)
        l_scr[...] = jnp.zeros(l_scr.shape, dtype=jnp.float32)
        acc_scr[...] = jnp.zeros(acc_scr.shape, dtype=jnp.float32)

    def _accumulate(apply_mask):
        # Scores: contract on the head dim so K is consumed in its stored layout
        # (no explicit k.T before the MXU).
        s = jnp.einsum('qh,kh->qk', q_ref[...], k_ref[...],
                       preferred_element_type=jnp.float32)           # (tq, tk)
        if apply_mask:
            # Only the diagonal tile needs the causal mask; tiles are square and
            # aligned (tq == tk, qi == ki) so the mask is purely local.
            tq, tk = s.shape
            row = lax.broadcasted_iota(jnp.int32, (tq, tk), 0)
            col = lax.broadcasted_iota(jnp.int32, (tq, tk), 1)
            s = jnp.where(col <= row, s, -jnp.inf)

        # Online (flash) softmax update; state kept in f32 VMEM scratch.
        m_prev = m_scr[...]
        m_new = jnp.maximum(m_prev, jnp.max(s, axis=-1, keepdims=True))
        alpha = jnp.exp(m_prev - m_new)
        p = jnp.exp(s - m_new)
        l_scr[...] = alpha * l_scr[...] + jnp.sum(p, axis=-1, keepdims=True)
        acc_scr[...] = alpha * acc_scr[...] + jnp.dot(
            p, v_ref[...], preferred_element_type=jnp.float32)
        m_scr[...] = m_new

    @pl.when(ki < qi)            # strictly below the diagonal: unmasked fast path
    def _full_block():
        _accumulate(apply_mask=False)

    @pl.when(ki == qi)           # diagonal tile: mask, then finalize this q tile
    def _diag_block():
        _accumulate(apply_mask=True)
        out = acc_scr[...] / l_scr[...]             # exact normalization (no approx)
        o_ref[...] = out.T.astype(o_ref.dtype)      # (H, tq) lane-dense store


def head_forward(x, w_key, w_query, w_value, *, block_q=None):
    """Causal single-head attention. x: (B, T, C); w_*: (C, H) (pre-transposed
    nn.Linear weights, bias=False). Returns (B, T, H)."""
    B, T, C = x.shape
    H = w_key.shape[-1]
    scale = C ** (-0.5)          # NOTE: the module scales by n_embd (C), not head_size

    # ---- projections hoisted out of the flash loop -------------------------
    # One (B*T, C) @ (C, H) GEMM each; the 1/sqrt(C) scale is folded into Wq.
    x2d = x.reshape(B * T, C)
    q = (x2d @ (w_query * scale)).reshape(B, T, H)
    k = (x2d @ w_key).reshape(B, T, H)
    v = (x2d @ w_value).reshape(B, T, H)

    if block_q is None:
        block_q = min(T, 256)    # 256 matches the v6e/v7x MXU; sweep 128 on v5e
    assert T % block_q == 0, "T must be a multiple of block_q"
    block_k = block_q            # square tiles -> the diagonal tile is qi == ki
    nq = T // block_q

    # ---- lower-triangle (qi, ki) schedule -----------------------------------
    # Fully masked (above-diagonal) tiles are never grid steps at all; the qi/ki
    # tables are scalar-prefetched into SMEM and drive data-dependent index_maps.
    pairs = [(qi, ki) for qi in range(nq) for ki in range(qi + 1)]
    qidx = jnp.asarray([p[0] for p in pairs], dtype=jnp.int32)
    kidx = jnp.asarray([p[1] for p in pairs], dtype=jnp.int32)
    n_pairs = len(pairs)

    grid_spec = pltpu.PrefetchScalarGridSpec(
        num_scalar_prefetch=2,
        grid=(B, n_pairs),       # batch axis stays "parallel" (feeds v7x's 2 TCs)
        in_specs=[
            pl.BlockSpec((None, block_q, H), lambda b, t, qt, kt: (b, qt[t], 0)),  # Q
            pl.BlockSpec((None, block_k, H), lambda b, t, qt, kt: (b, kt[t], 0)),  # K
            pl.BlockSpec((None, block_k, H), lambda b, t, qt, kt: (b, kt[t], 0)),  # V
        ],
        # Lane-dense output: an (H, block_q) slab with the q-tile on the lane axis.
        out_specs=pl.BlockSpec((None, H, block_q),
                               lambda b, t, qt, kt: (b, 0, qt[t])),
        scratch_shapes=[
            pltpu.VMEM((block_q, 1), jnp.float32),   # running max m
            pltpu.VMEM((block_q, 1), jnp.float32),   # running sum l
            pltpu.VMEM((block_q, H), jnp.float32),   # unnormalized accumulator
        ],
    )

    out_t = pl.pallas_call(
        _head_flash_kernel,
        out_shape=jax.ShapeDtypeStruct((B, H, T), x.dtype),
        grid_spec=grid_spec,
        compiler_params=pltpu.CompilerParams(
            dimension_semantics=("parallel", "arbitrary")),
    )(qidx, kidx, q, k, v)

    # (B, H, T) lane-dense kernel layout -> module layout (B, T, H).
    return jnp.swapaxes(out_t, -1, -2)


def head_reference(x, w_key, w_query, w_value):
    """Pure-JAX reference mirroring the PyTorch forward (eval mode, bias=False)."""
    B, T, C = x.shape
    k = x @ w_key
    q = x @ w_query
    v = x @ w_value
    wei = (q @ jnp.swapaxes(k, -2, -1)) * (C ** (-0.5))
    tril = jnp.tril(jnp.ones((T, T), dtype=bool))
    wei = jnp.where(tril, wei, -jnp.inf)
    wei = jax.nn.softmax(wei, axis=-1)
    return wei @ v


def _make_inputs(key, B, T, C, H):
    kx, kk, kq, kv = jax.random.split(key, 4)
    x = jax.random.normal(kx, (B, T, C), dtype=jnp.float32)
    bound = 1.0 / math.sqrt(C)
    w_key = jax.random.uniform(kk, (C, H), minval=-bound, maxval=bound,
                               dtype=jnp.float32)
    w_query = jax.random.uniform(kq, (C, H), minval=-bound, maxval=bound,
                                 dtype=jnp.float32)
    w_value = jax.random.uniform(kv, (C, H), minval=-bound, maxval=bound,
                                 dtype=jnp.float32)
    return x, w_key, w_query, w_value


if __name__ == "__main__":
    # Tolerance note: on TPU hardware the MXU multiplies f32 operands at
    # bf16-ish default precision, so kernel-vs-XLA-reference deltas of O(1e-3)
    # are expected (both paths are exact in interpret mode). 2e-2 still catches
    # any real masking / softmax / tiling bug, which would be O(0.1-1).
    ATOL = RTOL = 2e-2

    key = jax.random.PRNGKey(0)
    k1, k2 = jax.random.split(key)

    # 1) Small deterministic shapes: batch=2, seq(T)=8, n_embd(C)=32, head=16.
    B, T, C, H = 2, 8, 32, 16
    x, w_key, w_query, w_value = _make_inputs(k1, B, T, C, H)
    out = jax.block_until_ready(head_forward(x, w_key, w_query, w_value))
    ref = head_reference(x, w_key, w_query, w_value)
    assert out.shape == (B, T, H)
    assert jnp.allclose(out, ref, atol=ATOL, rtol=RTOL), "mismatch vs reference"

    # 2) Exercise the triangular multi-tile schedule (nq=2 -> 3 lower-tri pairs).
    B2, T2, C2, H2 = 2, 256, 32, 16
    x2, wk2, wq2, wv2 = _make_inputs(k2, B2, T2, C2, H2)
    out2 = jax.block_until_ready(head_forward(x2, wk2, wq2, wv2, block_q=128))
    ref2 = head_reference(x2, wk2, wq2, wv2)
    assert out2.shape == (B2, T2, H2)
    assert jnp.allclose(out2, ref2, atol=ATOL, rtol=RTOL), "tiled mismatch"

    print("KERNEL_OK")
</pallas_src>

<mosaic_0001>
module attributes {stable_mosaic.version = 11 : i64} {
  func.func @_head_flash_kernel(%arg0: i32, %arg1: i32, %arg2: memref<1xi32, #tpu.memory_space<smem>>, %arg3: memref<1xi32, #tpu.memory_space<smem>>, %arg4: memref<1x8x16xf32, #tpu.memory_space<vmem>>, %arg5: memref<1x8x16xf32, #tpu.memory_space<vmem>>, %arg6: memref<1x8x16xf32, #tpu.memory_space<vmem>>, %arg7: memref<1x16x8xf32, #tpu.memory_space<vmem>>, %arg8: memref<8x1xf32, #tpu.memory_space<vmem>>, %arg9: memref<8x1xf32, #tpu.memory_space<vmem>>, %arg10: memref<8x16xf32, #tpu.memory_space<vmem>>) attributes {dimension_semantics = [#tpu.dimension_semantics<parallel>, #tpu.dimension_semantics<arbitrary>], iteration_bounds = array<i64: 2, 1>, scalar_prefetch = 2 : i64, scratch_operands = 3 : i64, tpu.core_type = #tpu.core_type<tc>, window_params = [{transform_indices = @transform_0, window_bounds = array<i64: 1, 8, 16>}, {transform_indices = @transform_1, window_bounds = array<i64: 1, 8, 16>}, {transform_indices = @transform_2, window_bounds = array<i64: 1, 8, 16>}, {transform_indices = @transform_3, window_bounds = array<i64: 1, 16, 8>}]} {
    %0 = arith.index_cast %arg1 : i32 to index
    %1 = memref.load %arg2[%0] : memref<1xi32, #tpu.memory_space<smem>>
    %2 = arith.index_cast %arg1 : i32 to index
    %3 = memref.load %arg3[%2] : memref<1xi32, #tpu.memory_space<smem>>
    %c0_i32 = arith.constant 0 : i32
    %4 = arith.cmpi eq, %3, %c0_i32 : i32
    %5 = arith.extui %4 : i1 to i32
    %c0_i32_0 = arith.constant 0 : i32
    %6 = arith.cmpi ne, %5, %c0_i32_0 : i32
    scf.if %6 {
      %cst = arith.constant 0xFF800000 : f32
      %13 = vector.broadcast %cst : f32 to vector<8x1xf32>
      %c0 = arith.constant 0 : index
      %c0_3 = arith.constant 0 : index
      %14 = vector.load %arg8[%c0, %c0_3] : memref<8x1xf32, #tpu.memory_space<vmem>>, vector<8x1xf32>
      tpu.vector_store %arg8[%c0, %c0_3], %13 {strides = array<i32>} : memref<8x1xf32, #tpu.memory_space<vmem>>, vector<8x1xf32>,
      %cst_4 = arith.constant 0.000000e+00 : f32
      %15 = vector.broadcast %cst_4 : f32 to vector<8x1xf32>
      %c0_5 = arith.constant 0 : index
      %c0_6 = arith.constant 0 : index
      %16 = vector.load %arg9[%c0_5, %c0_6] : memref<8x1xf32, #tpu.memory_space<vmem>>, vector<8x1xf32>
      tpu.vector_store %arg9[%c0_5, %c0_6], %15 {strides = array<i32>} : memref<8x1xf32, #tpu.memory_space<vmem>>, vector<8x1xf32>,
      %cst_7 = arith.constant 0.000000e+00 : f32
      %17 = vector.broadcast %cst_7 : f32 to vector<8x16xf32>
      %c0_8 = arith.constant 0 : index
      %c0_9 = arith.constant 0 : index
      %18 = vector.load %arg10[%c0_8, %c0_9] : memref<8x16xf32, #tpu.memory_space<vmem>>, vector<8x16xf32>
      tpu.vector_store %arg10[%c0_8, %c0_9], %17 {strides = array<i32>} : memref<8x16xf32, #tpu.memory_space<vmem>>, vector<8x16xf32>,
    } else {
    }
    %7 = arith.cmpi slt, %3, %1 : i32
    %8 = arith.extui %7 : i1 to i32
    %c0_i32_1 = arith.constant 0 : i32
    %9 = arith.cmpi ne, %8, %c0_i32_1 : i32
    scf.if %9 {
      %c0 = arith.constant 0 : index
      %c0_3 = arith.constant 0 : index
      %c0_4 = arith.constant 0 : index
      %13 = vector.load %arg4[%c0, %c0_3, %c0_4] : memref<1x8x16xf32, #tpu.memory_space<vmem>>, vector<1x8x16xf32>
      %14 = vector.shape_cast %13 : vector<1x8x16xf32> to vector<8x16xf32>
      %c0_5 = arith.constant 0 : index
      %c0_6 = arith.constant 0 : index
      %c0_7 = arith.constant 0 : index
      %15 = vector.load %arg5[%c0_5, %c0_6, %c0_7] : memref<1x8x16xf32, #tpu.memory_space<vmem>>, vector<1x8x16xf32>
      %16 = vector.shape_cast %15 : vector<1x8x16xf32> to vector<8x16xf32>
      "tpu.trace_start"() <{level = 10 : i32, message = "qh,kh->qk"}> : () -> ()
      %cst = arith.constant dense<0.000000e+00> : vector<8x8xf32>
      %17 = tpu.matmul %14, %16, %cst {dimension_numbers = #tpu.dot_dimension_numbers<[1], [1], [0], [0], [0, 0, 1, 0], [], []>} : vector<8x16xf32>, vector<8x16xf32>, vector<8x8xf32> -> vector<8x8xf32>
      "tpu.trace_stop"() : () -> ()
      %c0_8 = arith.constant 0 : index
      %c0_9 = arith.constant 0 : index
      %18 = vector.load %arg8[%c0_8, %c0_9] : memref<8x1xf32, #tpu.memory_space<vmem>>, vector<8x1xf32>
      %cst_10 = arith.constant dense<0xFF800000> : vector<8xf32>
      %19 = vector.multi_reduction <maximumf>, %17, %cst_10 [1] : vector<8x8xf32> to vector<8xf32>
      %20 = vector.shape_cast %19 : vector<8xf32> to vector<8x1xf32>
      %21 = arith.maximumf %18, %20 : vector<8x1xf32>
      %22 = arith.subf %18, %21 : vector<8x1xf32>
      %23 = math.exp %22 : vector<8x1xf32>
      %24 = vector.broadcast %21 : vector<8x1xf32> to vector<8x8xf32>
      %25 = arith.subf %17, %24 : vector<8x8xf32>
      %26 = math.exp %25 : vector<8x8xf32>
      %c0_11 = arith.constant 0 : index
      %c0_12 = arith.constant 0 : index
      %27 = vector.load %arg9[%c0_11, %c0_12] : memref<8x1xf32, #tpu.memory_space<vmem>>, vector<8x1xf32>
      %28 = arith.mulf %23, %27 : vector<8x1xf32>
      %cst_13 = arith.constant dense<0.000000e+00> : vector<8xf32>
      %29 = vector.multi_reduction <add>, %26, %cst_13 [1] : vector<8x8xf32> to vector<8xf32>
      %30 = vector.shape_cast %29 : vector<8xf32> to vector<8x1xf32>
      %31 = arith.addf %28, %30 : vector<8x1xf32>
      %c0_14 = arith.constant 0 : index
      %c0_15 = arith.constant 0 : index
      %32 = vector.load %arg9[%c0_14, %c0_15] : memref<8x1xf32, #tpu.memory_space<vmem>>, vector<8x1xf32>
      tpu.vector_store %arg9[%c0_14, %c0_15], %31 {strides = array<i32>} : memref<8x1xf32, #tpu.memory_space<vmem>>, vector<8x1xf32>,
      %c0_16 = arith.constant 0 : index
      %c0_17 = arith.constant 0 : index
      %33 = vector.load %arg10[%c0_16, %c0_17] : memref<8x16xf32, #tpu.memory_space<vmem>>, vector<8x16xf32>
      %34 = vector.broadcast %23 : vector<8x1xf32> to vector<8x16xf32>
      %35 = arith.mulf %34, %33 : vector<8x16xf32>
      %c0_18 = arith.constant 0 : index
      %c0_19 = arith.constant 0 : index
      %c0_20 = arith.constant 0 : index
      %36 = vector.load %arg6[%c0_18, %c0_19, %c0_20] : memref<1x8x16xf32, #tpu.memory_space<vmem>>, vector<1x8x16xf32>
      %37 = vector.shape_cast %36 : vector<1x8x16xf32> to vector<8x16xf32>
      %cst_21 = arith.constant dense<0.000000e+00> : vector<8x16xf32>
      %38 = tpu.matmul %26, %37, %cst_21 {dimension_numbers = #tpu.dot_dimension_numbers<[1], [0], [0], [1], [0, 0, 1, 1], [], []>} : vector<8x8xf32>, vector<8x16xf32>, vector<8x16xf32> -> vector<8x16xf32>
      %39 = arith.addf %35, %38 : vector<8x16xf32>
      %c0_22 = arith.constant 0 : index
      %c0_23 = arith.constant 0 : index
      %40 = vector.load %arg10[%c0_22, %c0_23] : memref<8x16xf32, #tpu.memory_space<vmem>>, vector<8x16xf32>
      tpu.vector_store %arg10[%c0_22, %c0_23], %39 {strides = array<i32>} : memref<8x16xf32, #tpu.memory_space<vmem>>, vector<8x16xf32>,
      %c0_24 = arith.constant 0 : index
      %c0_25 = arith.constant 0 : index
      %41 = vector.load %arg8[%c0_24, %c0_25] : memref<8x1xf32, #tpu.memory_space<vmem>>, vector<8x1xf32>
      tpu.vector_store %arg8[%c0_24, %c0_25], %21 {strides = array<i32>} : memref<8x1xf32, #tpu.memory_space<vmem>>, vector<8x1xf32>,
    } else {
    }
    %10 = arith.cmpi eq, %3, %1 : i32
    %11 = arith.extui %10 : i1 to i32
    %c0_i32_2 = arith.constant 0 : i32
    %12 = arith.cmpi ne, %11, %c0_i32_2 : i32
    scf.if %12 {
      %c0 = arith.constant 0 : index
      %c0_3 = arith.constant 0 : index
      %c0_4 = arith.constant 0 : index
      %13 = vector.load %arg4[%c0, %c0_3, %c0_4] : memref<1x8x16xf32, #tpu.memory_space<vmem>>, vector<1x8x16xf32>
      %14 = vector.shape_cast %13 : vector<1x8x16xf32> to vector<8x16xf32>
      %c0_5 = arith.constant 0 : index
      %c0_6 = arith.constant 0 : index
      %c0_7 = arith.constant 0 : index
      %15 = vector.load %arg5[%c0_5, %c0_6, %c0_7] : memref<1x8x16xf32, #tpu.memory_space<vmem>>, vector<1x8x16xf32>
      %16 = vector.shape_cast %15 : vector<1x8x16xf32> to vector<8x16xf32>
      "tpu.trace_start"() <{level = 10 : i32, message = "qh,kh->qk"}> : () -> ()
      %cst = arith.constant dense<0.000000e+00> : vector<8x8xf32>
      %17 = tpu.matmul %14, %16, %cst {dimension_numbers = #tpu.dot_dimension_numbers<[1], [1], [0], [0], [0, 0, 1, 0], [], []>} : vector<8x16xf32>, vector<8x16xf32>, vector<8x8xf32> -> vector<8x8xf32>
      "tpu.trace_stop"() : () -> ()
      %18 = tpu.iota {dimensions = array<i32: 0>} : vector<8x8xi32>
      %19 = tpu.iota {dimensions = array<i32: 1>} : vector<8x8xi32>
      %20 = arith.cmpi sle, %19, %18 : vector<8x8xi32>
      %cst_8 = arith.constant 0xFF800000 : f32
      %21 = vector.broadcast %cst_8 : f32 to vector<8x8xf32>
      %22 = arith.select %20, %17, %21 : vector<8x8xi1>, vector<8x8xf32>
      %c0_9 = arith.constant 0 : index
      %c0_10 = arith.constant 0 : index
      %23 = vector.load %arg8[%c0_9, %c0_10] : memref<8x1xf32, #tpu.memory_space<vmem>>, vector<8x1xf32>
      %cst_11 = arith.constant dense<0xFF800000> : vector<8xf32>
      %24 = vector.multi_reduction <maximumf>, %22, %cst_11 [1] : vector<8x8xf32> to vector<8xf32>
      %25 = vector.shape_cast %24 : vector<8xf32> to vector<8x1xf32>
      %26 = arith.maximumf %23, %25 : vector<8x1xf32>
      %27 = arith.subf %23, %26 : vector<8x1xf32>
      %28 = math.exp %27 : vector<8x1xf32>
      %29 = vector.broadcast %26 : vector<8x1xf32> to vector<8x8xf32>
      %30 = arith.subf %22, %29 : vector<8x8xf32>
      %31 = math.exp %30 : vector<8x8xf32>
      %c0_12 = arith.constant 0 : index
      %c0_13 = arith.constant 0 : index
      %32 = vector.load %arg9[%c0_12, %c0_13] : memref<8x1xf32, #tpu.memory_space<vmem>>, vector<8x1xf32>
      %33 = arith.mulf %28, %32 : vector<8x1xf32>
      %cst_14 = arith.constant dense<0.000000e+00> : vector<8xf32>
      %34 = vector.multi_reduction <add>, %31, %cst_14 [1] : vector<8x8xf32> to vector<8xf32>
      %35 = vector.shape_cast %34 : vector<8xf32> to vector<8x1xf32>
      %36 = arith.addf %33, %35 : vector<8x1xf32>
      %c0_15 = arith.constant 0 : index
      %c0_16 = arith.constant 0 : index
      %37 = vector.load %arg9[%c0_15, %c0_16] : memref<8x1xf32, #tpu.memory_space<vmem>>, vector<8x1xf32>
      tpu.vector_store %arg9[%c0_15, %c0_16], %36 {strides = array<i32>} : memref<8x1xf32, #tpu.memory_space<vmem>>, vector<8x1xf32>,
      %c0_17 = arith.constant 0 : index
      %c0_18 = arith.constant 0 : index
      %38 = vector.load %arg10[%c0_17, %c0_18] : memref<8x16xf32, #tpu.memory_space<vmem>>, vector<8x16xf32>
      %39 = vector.broadcast %28 : vector<8x1xf32> to vector<8x16xf32>
      %40 = arith.mulf %39, %38 : vector<8x16xf32>
      %c0_19 = arith.constant 0 : index
      %c0_20 = arith.constant 0 : index
      %c0_21 = arith.constant 0 : index
      %41 = vector.load %arg6[%c0_19, %c0_20, %c0_21] : memref<1x8x16xf32, #tpu.memory_space<vmem>>, vector<1x8x16xf32>
      %42 = vector.shape_cast %41 : vector<1x8x16xf32> to vector<8x16xf32>
      %cst_22 = arith.constant dense<0.000000e+00> : vector<8x16xf32>
      %43 = tpu.matmul %31, %42, %cst_22 {dimension_numbers = #tpu.dot_dimension_numbers<[1], [0], [0], [1], [0, 0, 1, 1], [], []>} : vector<8x8xf32>, vector<8x16xf32>, vector<8x16xf32> -> vector<8x16xf32>
      %44 = arith.addf %40, %43 : vector<8x16xf32>
      %c0_23 = arith.constant 0 : index
      %c0_24 = arith.constant 0 : index
      %45 = vector.load %arg10[%c0_23, %c0_24] : memref<8x16xf32, #tpu.memory_space<vmem>>, vector<8x16xf32>
      tpu.vector_store %arg10[%c0_23, %c0_24], %44 {strides = array<i32>} : memref<8x16xf32, #tpu.memory_space<vmem>>, vector<8x16xf32>,
      %c0_25 = arith.constant 0 : index
      %c0_26 = arith.constant 0 : index
      %46 = vector.load %arg8[%c0_25, %c0_26] : memref<8x1xf32, #tpu.memory_space<vmem>>, vector<8x1xf32>
      tpu.vector_store %arg8[%c0_25, %c0_26], %26 {strides = array<i32>} : memref<8x1xf32, #tpu.memory_space<vmem>>, vector<8x1xf32>,
      %c0_27 = arith.constant 0 : index
      %c0_28 = arith.constant 0 : index
      %47 = vector.load %arg10[%c0_27, %c0_28] : memref<8x16xf32, #tpu.memory_space<vmem>>, vector<8x16xf32>
      %c0_29 = arith.constant 0 : index
      %c0_30 = arith.constant 0 : index
      %48 = vector.load %arg9[%c0_29, %c0_30] : memref<8x1xf32, #tpu.memory_space<vmem>>, vector<8x1xf32>
      %49 = vector.broadcast %48 : vector<8x1xf32> to vector<8x16xf32>
      %50 = arith.divf %47, %49 : vector<8x16xf32>
      %51 = tpu.transpose %50, [1, 0] : vector<8x16xf32> -> vector<16x8xf32>
      %c0_31 = arith.constant 0 : index
      %c0_32 = arith.constant 0 : index
      %c0_33 = arith.constant 0 : index
      %52 = vector.load %arg7[%c0_31, %c0_32, %c0_33] : memref<1x16x8xf32, #tpu.memory_space<vmem>>, vector<1x16x8xf32>
      %53 = vector.shape_cast %52 : vector<1x16x8xf32> to vector<16x8xf32>
      %54 = vector.shape_cast %51 : vector<16x8xf32> to vector<1x16x8xf32>
      tpu.vector_store %arg7[%c0_31, %c0_32, %c0_33], %54 {strides = array<i32>} : memref<1x16x8xf32, #tpu.memory_space<vmem>>, vector<1x16x8xf32>,
    } else {
    }
    return
  }
  func.func @transform_0(%arg0: i32, %arg1: i32, %arg2: memref<1xi32, #tpu.memory_space<smem>>, %arg3: memref<1xi32, #tpu.memory_space<smem>>) -> (i32, i32, i32) {
    %0 = arith.index_cast %arg1 : i32 to index
    %1 = memref.load %arg2[%0] : memref<1xi32, #tpu.memory_space<smem>>
    %c0_i32 = arith.constant 0 : i32
    %c0_i32_0 = arith.constant 0 : i32
    return %arg0, %1, %c0_i32 : i32, i32, i32
  }
  func.func @transform_1(%arg0: i32, %arg1: i32, %arg2: memref<1xi32, #tpu.memory_space<smem>>, %arg3: memref<1xi32, #tpu.memory_space<smem>>) -> (i32, i32, i32) {
    %0 = arith.index_cast %arg1 : i32 to index
    %1 = memref.load %arg3[%0] : memref<1xi32, #tpu.memory_space<smem>>
    %c0_i32 = arith.constant 0 : i32
    %c0_i32_0 = arith.constant 0 : i32
    return %arg0, %1, %c0_i32 : i32, i32, i32
  }
  func.func @transform_2(%arg0: i32, %arg1: i32, %arg2: memref<1xi32, #tpu.memory_space<smem>>, %arg3: memref<1xi32, #tpu.memory_space<smem>>) -> (i32, i32, i32) {
    %0 = arith.index_cast %arg1 : i32 to index
    %1 = memref.load %arg3[%0] : memref<1xi32, #tpu.memory_space<smem>>
    %c0_i32 = arith.constant 0 : i32
    %c0_i32_0 = arith.constant 0 : i32
    return %arg0, %1, %c0_i32 : i32, i32, i32
  }
  func.func @transform_3(%arg0: i32, %arg1: i32, %arg2: memref<1xi32, #tpu.memory_space<smem>>, %arg3: memref<1xi32, #tpu.memory_space<smem>>) -> (i32, i32, i32) {
    %0 = arith.index_cast %arg1 : i32 to index
    %1 = memref.load %arg2[%0] : memref<1xi32, #tpu.memory_space<smem>>
    %c0_i32 = arith.constant 0 : i32
    %c0_i32_0 = arith.constant 0 : i32
    return %arg0, %c0_i32, %1 : i32, i32, i32
  }
}

</mosaic_0001>

<llo_original>
// kernel: tpu_custom_call.1
$region0: #{tpu_custom_call.1}
  #allocation0 [shape = 'u32[]', space=smem, size = 0x4, offset = 0x4, fixed_abs, tag = 'smem constant byte address 0x4 - core index']
  #allocation1 [shape = 'u32[144,128]{1,0:T(1,128)}', space=vmem, size = 0x12000, scoped, tag = 'internal scratch']
  #allocation2 [shape = 'f32[8,1]{1,0:T(8,128)}', space=vmem, size = 0x1000, scoped, tag = 'scratch operand']
  #allocation3 [shape = 'f32[8,1]{1,0:T(8,128)}', space=vmem, size = 0x1000, scoped, tag = 'scratch operand']
  #allocation4 [shape = 'f32[8,16]{1,0:T(8,128)}', space=vmem, size = 0x1000, scoped, tag = 'scratch operand']
  #allocation5 [shape = 's32[1]{0}', space=sflag, size = 0x4, scoped, tag = 'scoped memory for tpu_custom_call.1']
  #allocation6 [shape = 's32[1]{0:T(128)S(6)}', space=smem, size = 0x200, scoped, tag = 'prefetched SMEM operand 0']
  #allocation7 [shape = 's32[1]{0:T(128)S(6)}', space=smem, size = 0x200, scoped, tag = 'prefetched SMEM operand 1']
  %s0 = inlined_call_operand.<no memory space> [shape: s32[1], index: 0, kind: input, shape index: {}]
  %s1 = inlined_call_operand.<no memory space> [shape: s32[1], index: 1, kind: input, shape index: {}]
  %s2 = inlined_call_operand.hbm [shape: f32[2,8,16], index: 2, kind: input, shape index: {}]
  %s3 = inlined_call_operand.hbm [shape: f32[2,8,16], index: 3, kind: input, shape index: {}]
  %s4 = inlined_call_operand.hbm [shape: f32[2,8,16], index: 4, kind: input, shape index: {}]
  %s5 = inlined_call_operand.vmem [shape: f32[2,16,8], index: 5, kind: output, shape index: {}]
  %s6 = sld [smem:[#allocation0]]
  $region69: #{tpu_custom_call.1} parent=0
    _
  %s8 = ssub.s32 1, %s6
  %s9 = scalar_select 0, %s8, %s6
  %10 = sst [smem:[#allocation6]] %s0
  %11 = sst [smem:[#allocation7]] %s1
  $region1: #{tpu_custom_call.1} parent=0
    #allocation8 [shape = 'u8[8192]{0}', space=vmem, size = 0x2000, scoped, tag = 'input window, operand 2']
    #allocation9 [shape = 's32[2]{0}', space=sflag, size = 0x8, scoped, tag = 'scoped memory for tpu_custom_call.1']
    #allocation10 [shape = 'u8[8192]{0}', space=vmem, size = 0x2000, scoped, tag = 'input window, operand 3']
    #allocation11 [shape = 's32[2]{0}', space=sflag, size = 0x8, scoped, tag = 'scoped memory for tpu_custom_call.1']
    #allocation12 [shape = 'u8[8192]{0}', space=vmem, size = 0x2000, scoped, tag = 'input window, operand 4']
    %12 = vsyncpa [#allocation9], 0
    %s13 = scalar_lea.sflag [#allocation9], 1
    %14 = vsyncpa %s13, 0
    %15 = vsyncpa [#allocation11], 0
    %s16 = scalar_lea.sflag [#allocation11], 1
    %17 = vsyncpa %s16, 0
    loop: start=0, step=1, limit=4
    $region2: #{tpu_custom_call.1} parent=1 // loop_pre_header
      _
    $region3: #{tpu_custom_call.1} parent=1 // loop_header
      %s19 = sphi 0, %s23
      %p20 = scmp.ge.s32.totalorder %s19, 4
      %s26 = sphi 0, %s38
      %s27 = sphi 0, %s34
      %s28 = sphi 0, %s26
      %s29 = sphi 0, %s27
      %s30 = sphi 0, %s28
      %s31 = sphi 0, %s29
      %s45 = sphi 0, %s47
      %s48 = sphi 0, %s45
      %s49 = sphi 0, %s48
      %s65 = sphi 0, %s49
      %s75 = sphi 0, %s77
      %s78 = sphi 0, %s75
      %s79 = sphi 0, %s78
      %s95 = sphi 0, %s79
      %s105 = sphi 0, %s107
      %s108 = sphi 0, %s105
      %s109 = sphi 0, %s108
      %s125 = sphi 0, %s109
      %s135 = sphi 0, %s137
      %s138 = sphi 0, %s135
      %s139 = sphi 0, %s138
      %s155 = sphi 0, %s139
    $region4: #{tpu_custom_call.1} parent=1 // loop_header_branch
      %22 = sbr.rel (%p20) target = $region8
    $region5: #{tpu_custom_call.1} parent=1 // loop_body
      %s24 = ssub.s32 %s19, 1
      %s25 = ssub.s32 %s19, 2
      %s32 = sadd.s32 1, %s27
      %p33 = scmp.ge.s32.totalorder %s32, 1
      %s34 = scalar_select %p33, 0, %s32
      %s35 = sadd.s32 1, %s26
      %s36 = scalar_select %p33, %s35, %s26
      %p37 = scmp.ge.s32.totalorder %s36, 2
      %s38 = scalar_select %p37, 0, %s36
      %s39 = sld [smem:[#allocation6 + %s27]]
      %s40 = sld [smem:[#allocation6 + %s34]]
      %s41 = ssub.s32 %s26, %s38
      %s42 = ssub.s32 %s39, %s40
      %s43 = sor.u32 %s41, %s42
      %p44 = scmp.eq.s32.totalorder %s43, 0
      %s46 = sadd.s32 %s45, 1
      %s47 = scalar_select %p44, %s45, %s46
      %p50 = pneg %p44
      %p51 = scmp.eq.s32.totalorder %s19, 1
      %p52 = por %p50, %p51
      %p53 = scmp.ne.s32.totalorder %s45, %s48
      %p54 = scmp.eq.s32.totalorder %s19, 0
      %p55 = por %p53, %p54
      %p56 = scmp.ne.s32.totalorder %s45, %s48
      %p57 = scmp.eq.s32.totalorder %s24, 1
      %p58 = por %p56, %p57
      %p59 = scmp.ne.s32.totalorder %s48, %s49
      %p60 = scmp.eq.s32.totalorder %s24, 0
      %p61 = por %p59, %p60
      %p62 = scmp.ne.s32.totalorder %s48, %s49
      %p63 = scmp.eq.s32.totalorder %s25, 1
      %p64 = por %p62, %p63
      %p66 = scmp.ne.s32.totalorder %s49, %s65
      %p67 = scmp.eq.s32.totalorder %s25, 0
      %p68 = por %p66, %p67
      %s69 = sld [smem:[#allocation7 + %s27]]
      %s70 = sld [smem:[#allocation7 + %s34]]
      %s71 = ssub.s32 %s26, %s38
      %s72 = ssub.s32 %s69, %s70
      %s73 = sor.u32 %s71, %s72
      %p74 = scmp.eq.s32.totalorder %s73, 0
      %s76 = sadd.s32 %s75, 1
      %s77 = scalar_select %p74, %s75, %s76
      %p80 = pneg %p74
      %p81 = scmp.eq.s32.totalorder %s19, 1
      %p82 = por %p80, %p81
      %p83 = scmp.ne.s32.totalorder %s75, %s78
      %p84 = scmp.eq.s32.totalorder %s19, 0
      %p85 = por %p83, %p84
      %p86 = scmp.ne.s32.totalorder %s75, %s78
      %p87 = scmp.eq.s32.totalorder %s24, 1
      %p88 = por %p86, %p87
      %p89 = scmp.ne.s32.totalorder %s78, %s79
      %p90 = scmp.eq.s32.totalorder %s24, 0
      %p91 = por %p89, %p90
      %p92 = scmp.ne.s32.totalorder %s78, %s79
      %p93 = scmp.eq.s32.totalorder %s25, 1
      %p94 = por %p92, %p93
      %p96 = scmp.ne.s32.totalorder %s79, %s95
      %p97 = scmp.eq.s32.totalorder %s25, 0
      %p98 = por %p96, %p97
      %s99 = sld [smem:[#allocation7 + %s27]]
      %s100 = sld [smem:[#allocation7 + %s34]]
      %s101 = ssub.s32 %s26, %s38
      %s102 = ssub.s32 %s99, %s100
      %s103 = sor.u32 %s101, %s102
      %p104 = scmp.eq.s32.totalorder %s103, 0
      %s106 = sadd.s32 %s105, 1
      %s107 = scalar_select %p104, %s105, %s106
      %p110 = pneg %p104
      %p111 = scmp.eq.s32.totalorder %s19, 1
      %p112 = por %p110, %p111
      %p113 = scmp.ne.s32.totalorder %s105, %s108
      %p114 = scmp.eq.s32.totalorder %s19, 0
      %p115 = por %p113, %p114
      %p116 = scmp.ne.s32.totalorder %s105, %s108
      %p117 = scmp.eq.s32.totalorder %s24, 1
      %p118 = por %p116, %p117
      %p119 = scmp.ne.s32.totalorder %s108, %s109
      %p120 = scmp.eq.s32.totalorder %s24, 0
      %p121 = por %p119, %p120
      %p122 = scmp.ne.s32.totalorder %s108, %s109
      %p123 = scmp.eq.s32.totalorder %s25, 1
      %p124 = por %p122, %p123
      %p126 = scmp.ne.s32.totalorder %s109, %s125
      %p127 = scmp.eq.s32.totalorder %s25, 0
      %p128 = por %p126, %p127
      %s129 = sld [smem:[#allocation6 + %s27]]
      %s130 = sld [smem:[#allocation6 + %s34]]
      %s131 = ssub.s32 %s26, %s38
      %s132 = ssub.s32 %s129, %s130
      %s133 = sor.u32 %s131, %s132
      %p134 = scmp.eq.s32.totalorder %s133, 0
      %s136 = sadd.s32 %s135, 1
      %s137 = scalar_select %p134, %s135, %s136
      %p140 = pneg %p134
      %p141 = scmp.eq.s32.totalorder %s19, 1
      %p142 = por %p140, %p141
      %p143 = scmp.ne.s32.totalorder %s135, %s138
      %p144 = scmp.eq.s32.totalorder %s19, 0
      %p145 = por %p143, %p144
      %p146 = scmp.ne.s32.totalorder %s135, %s138
      %p147 = scmp.eq.s32.totalorder %s24, 1
      %p148 = por %p146, %p147
      %p149 = scmp.ne.s32.totalorder %s138, %s139
      %p150 = scmp.eq.s32.totalorder %s24, 0
      %p151 = por %p149, %p150
      %p152 = scmp.ne.s32.totalorder %s138, %s139
      %p153 = scmp.eq.s32.totalorder %s25, 1
      %p154 = por %p152, %p153
      %p156 = scmp.ne.s32.totalorder %s139, %s155
      %p157 = scmp.eq.s32.totalorder %s25, 0
      %p158 = por %p156, %p157
      %p159 = scmp.le.s32.totalorder 1, %s19
      %p160 = scmp.lt.s32.totalorder %s19, 3
      %p161 = pnand %p159, %p160
      %p162 = pneg %p161
      // Predicated region
      $region9: #{tpu_custom_call.1} parent=5 // pred_check
        _
      $region10: #{tpu_custom_call.1} parent=5 // pred_check_branch
        %164 = sbr.rel (%p161) target = $region12
      $region11: #{tpu_custom_call.1} parent=5 // pred_region
        %s165 = ssub.s32 %s19, 1
      $region12: #{tpu_custom_call.1} parent=5 // pred_fallthru
        _
      %p166 = scmp.lt.s32.totalorder %s19, 2
      // Predicated region
      $region13: #{tpu_custom_call.1} parent=5 // pred_check
        %p167 = pneg %p166
      $region14: #{tpu_custom_call.1} parent=5 // pred_check_branch
        %169 = sbr.rel (%p167) target = $region16
      $region15: #{tpu_custom_call.1} parent=5 // pred_region
        // Predicated region
        $region17: #{tpu_custom_call.1} parent=15 // pred_check
          %p170 = pneg %p55
        $region18: #{tpu_custom_call.1} parent=15 // pred_check_branch
          %172 = sbr.rel (%p170) target = $region20
        $region19: #{tpu_custom_call.1} parent=15 // pred_region
          %s173 = sand.u32 %s45, 1
          %s174 = scalar_lea.sflag [#allocation9], %s173
          %s175 = sand.u32 %s45, 1
          %s176 = smul.addr %s175, 8
          %s177 = scalar_lea.vmem [#allocation8], %s176
          %s178 = sld [smem:[#allocation6 + %s27]]
          %s180 = ssub.s32 128, 128
          %181 = vsyncadd %s174, %s180
          %s182 = sadd.s32 %s178, %s26
          %s183 = smul.addr %s182, 128
          %s184 = scalar_lea.hbm %s2, %s183
          %s186 = sshll.u32 %s177, 4
          %s187 = int_to_ptr.vmem [resolvable:$true] %s186
          %189 = dma.hbm_to_vmem [thread:$0]  %s184, 128, %s187, %s174
        $region20: #{tpu_custom_call.1} parent=15 // pred_fallthru
          _
        // Predicated region
        $region21: #{tpu_custom_call.1} parent=15 // pred_check
          %p190 = pneg %p85
        $region22: #{tpu_custom_call.1} parent=15 // pred_check_branch
          %192 = sbr.rel (%p190) target = $region24
        $region23: #{tpu_custom_call.1} parent=15 // pred_region
          %s193 = sand.u32 %s19, 1
          %s194 = scalar_lea.sflag [#allocation11], %s193
          %s195 = sand.u32 %s75, 1
          %s196 = smul.addr %s195, 8
          %s197 = scalar_lea.vmem [#allocation10], %s196
          %s198 = sld [smem:[#allocation7 + %s27]]
          %s200 = ssub.s32 128, 128
          %201 = vsyncadd %s194, %s200
          %s202 = sadd.s32 %s198, %s26
          %s203 = smul.addr %s202, 128
          %s204 = scalar_lea.hbm %s3, %s203
          %s206 = sshll.u32 %s197, 4
          %s207 = int_to_ptr.vmem [resolvable:$true] %s206
          %209 = dma.hbm_to_vmem [thread:$0]  %s204, 128, %s207, %s194
        $region24: #{tpu_custom_call.1} parent=15 // pred_fallthru
          _
        // Predicated region
        $region25: #{tpu_custom_call.1} parent=15 // pred_check
          %p210 = pneg %p115
        $region26: #{tpu_custom_call.1} parent=15 // pred_check_branch
          %212 = sbr.rel (%p210) target = $region28
        $region27: #{tpu_custom_call.1} parent=15 // pred_region
          %s213 = sand.u32 %s19, 1
          %s214 = scalar_lea.sflag [#allocation11], %s213
          %s215 = sand.u32 %s105, 1
          %s216 = smul.addr %s215, 8
          %s217 = scalar_lea.vmem [#allocation12], %s216
          %s218 = sld [smem:[#allocation7 + %s27]]
          %s220 = ssub.s32 128, 128
          %221 = vsyncadd %s214, %s220
          %s222 = sadd.s32 %s218, %s26
          %s223 = smul.addr %s222, 128
          %s224 = scalar_lea.hbm %s4, %s223
          %s226 = sshll.u32 %s217, 4
          %s227 = int_to_ptr.vmem [resolvable:$true] %s226
          %229 = dma.hbm_to_vmem [thread:$0]  %s224, 128, %s227, %s214
        $region28: #{tpu_custom_call.1} parent=15 // pred_fallthru
          _
      $region16: #{tpu_custom_call.1} parent=5 // pred_fallthru
        _
      %p230 = scmp.le.s32.totalorder 1, %s19
      %p231 = scmp.lt.s32.totalorder %s19, 3
      %p232 = pnand %p230, %p231
      %p233 = pneg %p232
      // Predicated region
      $region29: #{tpu_custom_call.1} parent=5 // pred_check
        _
      $region30: #{tpu_custom_call.1} parent=5 // pred_check_branch
        %235 = sbr.rel (%p232) target = $region32
      $region31: #{tpu_custom_call.1} parent=5 // pred_region
        %s236 = ssub.s32 %s19, 1
        %s237 = sand.u32 %s48, 1
        %s238 = scalar_lea.sflag [#allocation9], %s237
        %s239 = sand.u32 %s48, 1
        %s240 = smul.addr %s239, 8
        %s241 = scalar_lea.vmem [#allocation8], %s240
        // Predicated region
        $region33: #{tpu_custom_call.1} parent=31 // pred_check
          %p242 = pneg %p61
        $region34: #{tpu_custom_call.1} parent=31 // pred_check_branch
          %244 = sbr.rel (%p242) target = $region36
        $region35: #{tpu_custom_call.1} parent=31 // pred_region
          %245 = dma.done %s238, 128
        $region36: #{tpu_custom_call.1} parent=31 // pred_fallthru
          _
        %s246 = sand.u32 %s24, 1
        %s247 = scalar_lea.sflag [#allocation11], %s246
        %s248 = sand.u32 %s78, 1
        %s249 = smul.addr %s248, 8
        %s250 = scalar_lea.vmem [#allocation10], %s249
        // Predicated region
        $region37: #{tpu_custom_call.1} parent=31 // pred_check
          %p251 = pneg %p91
        $region38: #{tpu_custom_call.1} parent=31 // pred_check_branch
          %253 = sbr.rel (%p251) target = $region40
        $region39: #{tpu_custom_call.1} parent=31 // pred_region
          %254 = dma.done %s247, 128
        $region40: #{tpu_custom_call.1} parent=31 // pred_fallthru
          _
        %s255 = sand.u32 %s24, 1
        %s256 = scalar_lea.sflag [#allocation11], %s255
        %s257 = sand.u32 %s108, 1
        %s258 = smul.addr %s257, 8
        %s259 = scalar_lea.vmem [#allocation12], %s258
        // Predicated region
        $region41: #{tpu_custom_call.1} parent=31 // pred_check
          %p260 = pneg %p121
        $region42: #{tpu_custom_call.1} parent=31 // pred_check_branch
          %262 = sbr.rel (%p260) target = $region44
        $region43: #{tpu_custom_call.1} parent=31 // pred_region
          %263 = dma.done %s256, 128
        $region44: #{tpu_custom_call.1} parent=31 // pred_fallthru
          _
        %s264 = sand.u32 %s48, 1
        %s265 = scalar_lea.sflag [#allocation9], %s264
        %s266 = sand.u32 %s48, 1
        %s267 = smul.addr %s266, 8
        %s268 = scalar_lea.vmem [#allocation8], %s267
        %p269 = pneg %p61
        %p270 = pneg %p58
        %s271 = sand.u32 %s24, 1
        %s272 = scalar_lea.sflag [#allocation11], %s271
        %s273 = sand.u32 %s78, 1
        %s274 = smul.addr %s273, 8
        %s275 = scalar_lea.vmem [#allocation10], %s274
        %p276 = pneg %p91
        %p277 = pneg %p88
        %s278 = sand.u32 %s24, 1
        %s279 = scalar_lea.sflag [#allocation11], %s278
        %s280 = sand.u32 %s108, 1
        %s281 = smul.addr %s280, 8
        %s282 = scalar_lea.vmem [#allocation12], %s281
        %p283 = pneg %p121
        %p284 = pneg %p118
        %p285 = pneg %p151
        %p286 = pneg %p148
        %s287 = sld [smem:[#allocation6 + %s29]]
        %p288 = scmp.lt.s32.totalorder %s28, 1
        %s289 = scalar_select %p288, %s28, 1
        %p290 = scmp.lt.s32.totalorder %s287, 0
        %s291 = scalar_select %p290, %s287, 0
        %s292 = smul.addr %s289, 2
        %s293 = sadd.s32 %s291, %s292
        %s294 = smul.addr %s293, 8
        %s295 = scalar_lea.vmem %s5, %s294
        %s296 = sld [smem:[#allocation6 + %s29]]
        %s297 = sld [smem:[#allocation7 + %s29]]
        %s298 = sld [smem:[#allocation7 + %s29]]
        %s299 = sld [smem:[#allocation6 + %s29]]
        %p300 = scmp.lt.s32.totalorder %s28, 1
        %s301 = scalar_select %p300, %s28, 1
        %p302 = scmp.lt.s32.totalorder %s299, 0
        %s303 = scalar_select %p302, %s299, 0
        %s304 = smul.addr %s301, 2
        %s305 = sadd.s32 %s303, %s304
        %s306 = smul.addr %s305, 8
        %s307 = scalar_lea.vmem %s5, %s306
        %s308 = sld [smem:[#allocation6 + %s29]]
        %s309 = sld [smem:[#allocation6 + %s29]]
        %s310 = sld [smem:[#allocation7 + %s29]]
        %p311 = scmp.eq.s32.totalorder %s310, 0
        // Predicated region
        $region45: #{tpu_custom_call.1} parent=31 // pred_check
          %p312 = pneg %p311
        $region46: #{tpu_custom_call.1} parent=31 // pred_check_branch
          %314 = sbr.rel (%p312) target = $region48
        $region47: #{tpu_custom_call.1} parent=31 // pred_region
          %vm315 = vcmask 7168
          %316 = vst.msk [vmem:[#allocation2] sm:$0xff] %vm315, -inf
          %317 = vst.msk [vmem:[#allocation3] sm:$0xff] %vm315, 0.0
          %vm318 = vcmask 130048
          %319 = vst.msk [vmem:[#allocation4] sm:$0xff] %vm318, 0.0
        $region48: #{tpu_custom_call.1} parent=31 // pred_fallthru
          _
        %p320 = scmp.lt.s32.totalorder %s310, %s309
        // Predicated region
        $region49: #{tpu_custom_call.1} parent=31 // pred_check
          %p321 = pneg %p320
        $region50: #{tpu_custom_call.1} parent=31 // pred_check_branch
          %323 = sbr.rel (%p321) target = $region52
        $region51: #{tpu_custom_call.1} parent=31 // pred_region
          %v324 = vld [vmem:[%s241] sm:$0xff]
          %v325 = vld [vmem:[%s250] sm:$0xff]
          %vm326 = vcmask 130048
          %v328 = vsel %vm326, %v324, 0
          %v331 = vsel %vm326, %v325, 0
          %333 = vmatprep.subr.mxu0 0.0
          %334 = vmatpush1.xpose.msra.mxu0 0.0
          %335 = vmatprep.subr.mxu0 0.0
          %336 = vmatpush1.xpose.msra.mxu0 0.0
          %337 = vmatprep.subr.mxu0 0.0
          %338 = vmatpush1.xpose.msra.mxu0 0.0
          %339 = vmatprep.subr.mxu0 0.0
          %340 = vmatpush1.xpose.msra.mxu0 0.0
          %341 = vmatprep.subr.mxu0 0.0
          %342 = vmatpush1.xpose.msra.mxu0 0.0
          %343 = vmatprep.subr.mxu0 0.0
          %344 = vmatpush1.xpose.msra.mxu0 0.0
          %345 = vmatprep.subr.mxu0 0.0
          %346 = vmatpush1.xpose.msra.mxu0 0.0
          %347 = vmatprep.subr.mxu0 0.0
          %348 = vmatpush1.xpose.msra.mxu0 0.0
          %349 = vmatprep.subr.mxu0 0.0
          %350 = vmatpush1.xpose.msra.mxu0 0.0
          %351 = vmatprep.subr.mxu0 0.0
          %352 = vmatpush1.xpose.msra.mxu0 0.0
          %353 = vmatprep.subr.mxu0 0.0
          %354 = vmatpush1.xpose.msra.mxu0 0.0
          %355 = vmatprep.subr.mxu0 0.0
          %356 = vmatpush1.xpose.msra.mxu0 0.0
          %357 = vmatprep.subr.mxu0 0.0
          %358 = vmatpush1.xpose.msra.mxu0 0.0
          %359 = vmatprep.subr.mxu0 0.0
          %360 = vmatpush1.xpose.msra.mxu0 0.0
          %361 = vmatprep.subr.mxu0 0.0
          %362 = vmatpush1.xpose.msra.mxu0 0.0
          %363 = vmatprep.subr.mxu0 0.0
          %364 = vmatpush1.xpose.msra.mxu0 %v331
          %365 = vmatprep.subr.mxu0 0.0
          %366 = vmatpush2.xpose.msra.mxu0 0.0
          %367 = vmatprep.subr.mxu0 0.0
          %368 = vmatpush2.xpose.msra.mxu0 0.0
          %369 = vmatprep.subr.mxu0 0.0
          %370 = vmatpush2.xpose.msra.mxu0 0.0
          %371 = vmatprep.subr.mxu0 0.0
          %372 = vmatpush2.xpose.msra.mxu0 0.0
          %373 = vmatprep.subr.mxu0 0.0
          %374 = vmatpush2.xpose.msra.mxu0 0.0
          %375 = vmatprep.subr.mxu0 0.0
          %376 = vmatpush2.xpose.msra.mxu0 0.0
          %377 = vmatprep.subr.mxu0 0.0
          %378 = vmatpush2.xpose.msra.mxu0 0.0
          %379 = vmatprep.subr.mxu0 0.0
          %380 = vmatpush2.xpose.msra.mxu0 0.0
          %381 = vmatprep.subr.mxu0 0.0
          %382 = vmatpush2.xpose.msra.mxu0 0.0
          %383 = vmatprep.subr.mxu0 0.0
          %384 = vmatpush2.xpose.msra.mxu0 0.0
          %385 = vmatprep.subr.mxu0 0.0
          %386 = vmatpush2.xpose.msra.mxu0 0.0
          %387 = vmatprep.subr.mxu0 0.0
          %388 = vmatpush2.xpose.msra.mxu0 0.0
          %389 = vmatprep.subr.mxu0 0.0
          %390 = vmatpush2.xpose.msra.mxu0 0.0
          %391 = vmatprep.subr.mxu0 0.0
          %392 = vmatpush2.xpose.msra.mxu0 0.0
          %393 = vmatprep.subr.mxu0 0.0
          %394 = vmatpush2.xpose.msra.mxu0 0.0
          %395 = vmatprep.subr.mxu0 0.0
          %396 = vmatpush2.xpose.msra.mxu0 0.0
          %397 = vmatprep.mubr.f32.mxu0 0.0
          %398 = vmatmul.mubr.f32.gmra.mxu0 %v328
          %v399 = vpop.f32.mrf.mxu0
          %v400 = vadd.f32 0.0, %v399
          %v401 = vpop.f32.mrf.mxu0
          %402 = vdwg.mxu0
          %v403 = vld [vmem:[#allocation2] sm:$0xff]
          %vm404 = vcmask 64512
          %v405 = vsel %vm404, %v400, -inf
          %406 = vmax.xlane.f32.xlu0 %v405
          %v407 = vpop.xlane.xlu0 %406
          %v408 = vmax.f32 %v403, %v407
          %v409 = vsub.f32 %v403, %v408
          %v410 = vmul.f32 %v409, 1.442695
          %v411 = vpow.pop %v410
          %413 = vset.pattern.permute.xlu0 0
          %414 = vperm.xlu0 %413, %v408
          %v415 = vpop.permute.xlu0 %414
          %v417 = vsub.f32 %v400, %v415
          %v418 = vmul.f32 %v417, 1.442695
          %v419 = vpow.pop %v418
          %v420 = vld [vmem:[#allocation3] sm:$0xff]
          %v421 = vmul.f32 %v411, %v420
          %v422 = vsel %vm404, %v419, 0.0
          %423 = vadd.xlane.f32.xlu0 %v422
          %v424 = vpop.xlane.xlu0 %423
          %v425 = vadd.f32 %v421, %v424
          %vm426 = vcmask 7168
          %427 = vst.msk [vmem:[#allocation3] sm:$0xff] %vm426, %v425
          %v428 = vld [vmem:[#allocation4] sm:$0xff]
          %430 = vset.pattern.permute.xlu0 0
          %431 = vperm.xlu0 %430, %v411
          %v432 = vpop.permute.xlu0 %431
          %v434 = vmul.f32 %v432, %v428
          %v435 = vld [vmem:[%s259] sm:$0xff]
          %v437 = vsel %vm404, %v419, 0
          %439 = vmatprep.subr.mxu0 0.0
          %440 = vmatpush1.msra.mxu0 0.0
          %441 = vmatprep.subr.mxu0 0.0
          %442 = vmatpush1.msra.mxu0 0.0
          %443 = vmatprep.subr.mxu0 0.0
          %444 = vmatpush1.msra.mxu0 0.0
          %445 = vmatprep.subr.mxu0 0.0
          %446 = vmatpush1.msra.mxu0 0.0
          %447 = vmatprep.subr.mxu0 0.0
          %448 = vmatpush1.msra.mxu0 0.0
          %449 = vmatprep.subr.mxu0 0.0
          %450 = vmatpush1.msra.mxu0 0.0
          %451 = vmatprep.subr.mxu0 0.0
          %452 = vmatpush1.msra.mxu0 0.0
          %453 = vmatprep.subr.mxu0 0.0
          %454 = vmatpush1.msra.mxu0 0.0
          %455 = vmatprep.subr.mxu0 0.0
          %456 = vmatpush1.msra.mxu0 0.0
          %457 = vmatprep.subr.mxu0 0.0
          %458 = vmatpush1.msra.mxu0 0.0
          %459 = vmatprep.subr.mxu0 0.0
          %460 = vmatpush1.msra.mxu0 0.0
          %461 = vmatprep.subr.mxu0 0.0
          %462 = vmatpush1.msra.mxu0 0.0
          %463 = vmatprep.subr.mxu0 0.0
          %464 = vmatpush1.msra.mxu0 0.0
          %465 = vmatprep.subr.mxu0 0.0
          %466 = vmatpush1.msra.mxu0 0.0
          %467 = vmatprep.subr.mxu0 0.0
          %468 = vmatpush1.msra.mxu0 0.0
          %469 = vmatprep.subr.mxu0 0.0
          %470 = vmatpush1.msra.mxu0 %v435
          %471 = vmatprep.subr.mxu0 0.0
          %472 = vmatpush2.msra.mxu0 0.0
          %473 = vmatprep.subr.mxu0 0.0
          %474 = vmatpush2.msra.mxu0 0.0
          %475 = vmatprep.subr.mxu0 0.0
          %476 = vmatpush2.msra.mxu0 0.0
          %477 = vmatprep.subr.mxu0 0.0
          %478 = vmatpush2.msra.mxu0 0.0
          %479 = vmatprep.subr.mxu0 0.0
          %480 = vmatpush2.msra.mxu0 0.0
          %481 = vmatprep.subr.mxu0 0.0
          %482 = vmatpush2.msra.mxu0 0.0
          %483 = vmatprep.subr.mxu0 0.0
          %484 = vmatpush2.msra.mxu0 0.0
          %485 = vmatprep.subr.mxu0 0.0
          %486 = vmatpush2.msra.mxu0 0.0
          %487 = vmatprep.subr.mxu0 0.0
          %488 = vmatpush2.msra.mxu0 0.0
          %489 = vmatprep.subr.mxu0 0.0
          %490 = vmatpush2.msra.mxu0 0.0
          %491 = vmatprep.subr.mxu0 0.0
          %492 = vmatpush2.msra.mxu0 0.0
          %493 = vmatprep.subr.mxu0 0.0
          %494 = vmatpush2.msra.mxu0 0.0
          %495 = vmatprep.subr.mxu0 0.0
          %496 = vmatpush2.msra.mxu0 0.0
          %497 = vmatprep.subr.mxu0 0.0
          %498 = vmatpush2.msra.mxu0 0.0
          %499 = vmatprep.subr.mxu0 0.0
          %500 = vmatpush2.msra.mxu0 0.0
          %501 = vmatprep.subr.mxu0 0.0
          %502 = vmatpush2.msra.mxu0 0.0
          %503 = vmatprep.mubr.f32.mxu0 0.0
          %504 = vmatmul.mubr.f32.gmra.mxu0 %v437
          %v505 = vpop.f32.mrf.mxu0
          %v506 = vadd.f32 0.0, %v505
          %v507 = vpop.f32.mrf.mxu0
          %508 = vdwg.mxu0
          %v509 = vadd.f32 %v434, %v506
          %510 = vst.msk [vmem:[#allocation4] sm:$0xff] %vm326, %v509
          %511 = vst.msk [vmem:[#allocation2] sm:$0xff] %vm426, %v408
        $region52: #{tpu_custom_call.1} parent=31 // pred_fallthru
          _
        %p512 = scmp.eq.s32.totalorder %s310, %s309
        // Predicated region
        $region53: #{tpu_custom_call.1} parent=31 // pred_check
          %p513 = pneg %p512
        $region54: #{tpu_custom_call.1} parent=31 // pred_check_branch
          %515 = sbr.rel (%p513) target = $region56
        $region55: #{tpu_custom_call.1} parent=31 // pred_region
          %v516 = vld [vmem:[%s241] sm:$0xff]
          %v517 = vld [vmem:[%s250] sm:$0xff]
          %vm518 = vcmask 130048
          %v520 = vsel %vm518, %v516, 0
          %v523 = vsel %vm518, %v517, 0
          %525 = vmatprep.subr.mxu0 0.0
          %526 = vmatpush1.xpose.msra.mxu0 0.0
          %527 = vmatprep.subr.mxu0 0.0
          %528 = vmatpush1.xpose.msra.mxu0 0.0
          %529 = vmatprep.subr.mxu0 0.0
          %530 = vmatpush1.xpose.msra.mxu0 0.0
          %531 = vmatprep.subr.mxu0 0.0
          %532 = vmatpush1.xpose.msra.mxu0 0.0
          %533 = vmatprep.subr.mxu0 0.0
          %534 = vmatpush1.xpose.msra.mxu0 0.0
          %535 = vmatprep.subr.mxu0 0.0
          %536 = vmatpush1.xpose.msra.mxu0 0.0
          %537 = vmatprep.subr.mxu0 0.0
          %538 = vmatpush1.xpose.msra.mxu0 0.0
          %539 = vmatprep.subr.mxu0 0.0
          %540 = vmatpush1.xpose.msra.mxu0 0.0
          %541 = vmatprep.subr.mxu0 0.0
          %542 = vmatpush1.xpose.msra.mxu0 0.0
          %543 = vmatprep.subr.mxu0 0.0
          %544 = vmatpush1.xpose.msra.mxu0 0.0
          %545 = vmatprep.subr.mxu0 0.0
          %546 = vmatpush1.xpose.msra.mxu0 0.0
          %547 = vmatprep.subr.mxu0 0.0
          %548 = vmatpush1.xpose.msra.mxu0 0.0
          %549 = vmatprep.subr.mxu0 0.0
          %550 = vmatpush1.xpose.msra.mxu0 0.0
          %551 = vmatprep.subr.mxu0 0.0
          %552 = vmatpush1.xpose.msra.mxu0 0.0
          %553 = vmatprep.subr.mxu0 0.0
          %554 = vmatpush1.xpose.msra.mxu0 0.0
          %555 = vmatprep.subr.mxu0 0.0
          %556 = vmatpush1.xpose.msra.mxu0 %v523
          %557 = vmatprep.subr.mxu0 0.0
          %558 = vmatpush2.xpose.msra.mxu0 0.0
          %559 = vmatprep.subr.mxu0 0.0
          %560 = vmatpush2.xpose.msra.mxu0 0.0
          %561 = vmatprep.subr.mxu0 0.0
          %562 = vmatpush2.xpose.msra.mxu0 0.0
          %563 = vmatprep.subr.mxu0 0.0
          %564 = vmatpush2.xpose.msra.mxu0 0.0
          %565 = vmatprep.subr.mxu0 0.0
          %566 = vmatpush2.xpose.msra.mxu0 0.0
          %567 = vmatprep.subr.mxu0 0.0
          %568 = vmatpush2.xpose.msra.mxu0 0.0
          %569 = vmatprep.subr.mxu0 0.0
          %570 = vmatpush2.xpose.msra.mxu0 0.0
          %571 = vmatprep.subr.mxu0 0.0
          %572 = vmatpush2.xpose.msra.mxu0 0.0
          %573 = vmatprep.subr.mxu0 0.0
          %574 = vmatpush2.xpose.msra.mxu0 0.0
          %575 = vmatprep.subr.mxu0 0.0
          %576 = vmatpush2.xpose.msra.mxu0 0.0
          %577 = vmatprep.subr.mxu0 0.0
          %578 = vmatpush2.xpose.msra.mxu0 0.0
          %579 = vmatprep.subr.mxu0 0.0
          %580 = vmatpush2.xpose.msra.mxu0 0.0
          %581 = vmatprep.subr.mxu0 0.0
          %582 = vmatpush2.xpose.msra.mxu0 0.0
          %583 = vmatprep.subr.mxu0 0.0
          %584 = vmatpush2.xpose.msra.mxu0 0.0
          %585 = vmatprep.subr.mxu0 0.0
          %586 = vmatpush2.xpose.msra.mxu0 0.0
          %587 = vmatprep.subr.mxu0 0.0
          %588 = vmatpush2.xpose.msra.mxu0 0.0
          %589 = vmatprep.mubr.f32.mxu0 0.0
          %590 = vmatmul.mubr.f32.gmra.mxu0 %v520
          %v591 = vpop.f32.mrf.mxu0
          %v592 = vadd.f32 0.0, %v591
          %v593 = vpop.f32.mrf.mxu0
          %594 = vdwg.mxu0
          %v595 = vlaneseq
          %v596 = vshrl.u32 %v595, 7
          %v597 = vlaneseq
          %v598 = vand.u32 %v597, 127
          %vm599 = vcmp.le.s32.totalorder %v598, %v596
          %v600 = vsel %vm599, %v592, -inf
          %v601 = vld [vmem:[#allocation2] sm:$0xff]
          %vm602 = vcmask 64512
          %v603 = vsel %vm602, %v600, -inf
          %604 = vmax.xlane.f32.xlu0 %v603
          %v605 = vpop.xlane.xlu0 %604
          %v606 = vmax.f32 %v601, %v605
          %v607 = vsub.f32 %v601, %v606
          %v608 = vmul.f32 %v607, 1.442695
          %v609 = vpow.pop %v608
          %611 = vset.pattern.permute.xlu0 0
          %612 = vperm.xlu0 %611, %v606
          %v613 = vpop.permute.xlu0 %612
          %v615 = vsub.f32 %v600, %v613
          %v616 = vmul.f32 %v615, 1.442695
          %v617 = vpow.pop %v616
          %v618 = vld [vmem:[#allocation3] sm:$0xff]
          %v619 = vmul.f32 %v609, %v618
          %v620 = vsel %vm602, %v617, 0.0
          %621 = vadd.xlane.f32.xlu0 %v620
          %v622 = vpop.xlane.xlu0 %621
          %v623 = vadd.f32 %v619, %v622
          %vm624 = vcmask 7168
          %625 = vst.msk [vmem:[#allocation3] sm:$0xff] %vm624, %v623
          %v626 = vld [vmem:[#allocation4] sm:$0xff]
          %628 = vset.pattern.permute.xlu0 0
          %629 = vperm.xlu0 %628, %v609
          %v630 = vpop.permute.xlu0 %629
          %v632 = vmul.f32 %v630, %v626
          %v633 = vld [vmem:[%s259] sm:$0xff]
          %v635 = vsel %vm602, %v617, 0
          %637 = vmatprep.subr.mxu0 0.0
          %638 = vmatpush1.msra.mxu0 0.0
          %639 = vmatprep.subr.mxu0 0.0
          %640 = vmatpush1.msra.mxu0 0.0
          %641 = vmatprep.subr.mxu0 0.0
          %642 = vmatpush1.msra.mxu0 0.0
          %643 = vmatprep.subr.mxu0 0.0
          %644 = vmatpush1.msra.mxu0 0.0
          %645 = vmatprep.subr.mxu0 0.0
          %646 = vmatpush1.msra.mxu0 0.0
          %647 = vmatprep.subr.mxu0 0.0
          %648 = vmatpush1.msra.mxu0 0.0
          %649 = vmatprep.subr.mxu0 0.0
          %650 = vmatpush1.msra.mxu0 0.0
          %651 = vmatprep.subr.mxu0 0.0
          %652 = vmatpush1.msra.mxu0 0.0
          %653 = vmatprep.subr.mxu0 0.0
          %654 = vmatpush1.msra.mxu0 0.0
          %655 = vmatprep.subr.mxu0 0.0
          %656 = vmatpush1.msra.mxu0 0.0
          %657 = vmatprep.subr.mxu0 0.0
          %658 = vmatpush1.msra.mxu0 0.0
          %659 = vmatprep.subr.mxu0 0.0
          %660 = vmatpush1.msra.mxu0 0.0
          %661 = vmatprep.subr.mxu0 0.0
          %662 = vmatpush1.msra.mxu0 0.0
          %663 = vmatprep.subr.mxu0 0.0
          %664 = vmatpush1.msra.mxu0 0.0
          %665 = vmatprep.subr.mxu0 0.0
          %666 = vmatpush1.msra.mxu0 0.0
          %667 = vmatprep.subr.mxu0 0.0
          %668 = vmatpush1.msra.mxu0 %v633
          %669 = vmatprep.subr.mxu0 0.0
          %670 = vmatpush2.msra.mxu0 0.0
          %671 = vmatprep.subr.mxu0 0.0
          %672 = vmatpush2.msra.mxu0 0.0
          %673 = vmatprep.subr.mxu0 0.0
          %674 = vmatpush2.msra.mxu0 0.0
          %675 = vmatprep.subr.mxu0 0.0
          %676 = vmatpush2.msra.mxu0 0.0
          %677 = vmatprep.subr.mxu0 0.0
          %678 = vmatpush2.msra.mxu0 0.0
          %679 = vmatprep.subr.mxu0 0.0
          %680 = vmatpush2.msra.mxu0 0.0
          %681 = vmatprep.subr.mxu0 0.0
          %682 = vmatpush2.msra.mxu0 0.0
          %683 = vmatprep.subr.mxu0 0.0
          %684 = vmatpush2.msra.mxu0 0.0
          %685 = vmatprep.subr.mxu0 0.0
          %686 = vmatpush2.msra.mxu0 0.0
          %687 = vmatprep.subr.mxu0 0.0
          %688 = vmatpush2.msra.mxu0 0.0
          %689 = vmatprep.subr.mxu0 0.0
          %690 = vmatpush2.msra.mxu0 0.0
          %691 = vmatprep.subr.mxu0 0.0
          %692 = vmatpush2.msra.mxu0 0.0
          %693 = vmatprep.subr.mxu0 0.0
          %694 = vmatpush2.msra.mxu0 0.0
          %695 = vmatprep.subr.mxu0 0.0
          %696 = vmatpush2.msra.mxu0 0.0
          %697 = vmatprep.subr.mxu0 0.0
          %698 = vmatpush2.msra.mxu0 0.0
          %699 = vmatprep.subr.mxu0 0.0
          %700 = vmatpush2.msra.mxu0 0.0
          %701 = vmatprep.mubr.f32.mxu0 0.0
          %702 = vmatmul.mubr.f32.gmra.mxu0 %v635
          %v703 = vpop.f32.mrf.mxu0
          %v704 = vadd.f32 0.0, %v703
          %v705 = vpop.f32.mrf.mxu0
          %706 = vdwg.mxu0
          %v707 = vadd.f32 %v632, %v704
          %708 = vst.msk [vmem:[#allocation4] sm:$0xff] %vm518, %v707
          %709 = vst.msk [vmem:[#allocation2] sm:$0xff] %vm624, %v606
          %v710 = vld [vmem:[#allocation4] sm:$0xff]
          %v711 = vld [vmem:[#allocation3] sm:$0xff]
          %713 = vset.pattern.permute.xlu0 0
          %714 = vperm.xlu0 %713, %v711
          %v715 = vpop.permute.xlu0 %714
          %v717 = vrcp.pop %v715
          %v718 = vmul.f32 %v710, %v717
          %719 = vxpose.xlu0.b32.start [1/16] %v718, 128
          %720 = vxpose.xlu0.b32.cont [2/16] 0.0, 128
          %721 = vxpose.xlu0.b32.cont [3/16] 0.0, 128
          %722 = vxpose.xlu0.b32.cont [4/16] 0.0, 128
          %723 = vxpose.xlu0.b32.cont [5/16] 0.0, 128
          %724 = vxpose.xlu0.b32.cont [6/16] 0.0, 128
          %725 = vxpose.xlu0.b32.cont [7/16] 0.0, 128
          %726 = vxpose.xlu0.b32.cont [8/16] 0.0, 128
          %727 = vxpose.xlu0.b32.cont [9/16] 0.0, 128
          %728 = vxpose.xlu0.b32.cont [10/16] 0.0, 128
          %729 = vxpose.xlu0.b32.cont [11/16] 0.0, 128
          %730 = vxpose.xlu0.b32.cont [12/16] 0.0, 128
          %731 = vxpose.xlu0.b32.cont [13/16] 0.0, 128
          %732 = vxpose.xlu0.b32.cont [14/16] 0.0, 128
          %733 = vxpose.xlu0.b32.cont [15/16] 0.0, 128
          %734 = vxpose.xlu0.b32.end [16/16] 0.0, 128
          %v735 = vpop.trf.xlu0
          %v736 = vpop.trf.xlu0
          %v737 = vpop.trf.xlu0
          %v738 = vpop.trf.xlu0
          %v739 = vpop.trf.xlu0
          %v740 = vpop.trf.xlu0
          %v741 = vpop.trf.xlu0
          %v742 = vpop.trf.xlu0
          %v743 = vpop.trf.xlu0
          %v744 = vpop.trf.xlu0
          %v745 = vpop.trf.xlu0
          %v746 = vpop.trf.xlu0
          %v747 = vpop.trf.xlu0
          %v748 = vpop.trf.xlu0
          %v749 = vpop.trf.xlu0
          %v750 = vpop.trf.xlu0
          %751 = vst.msk [vmem:[%s307] sm:$0xff] %vm602, %v735
          %752 = vst.msk [vmem:[%s307 + $0x8] sm:$0xff] %vm602, %v736
        $region56: #{tpu_custom_call.1} parent=31 // pred_fallthru
          _
        %s753 = sld [smem:[#allocation6 + %s29]]
        %p754 = scmp.lt.s32.totalorder %s28, 1
        %s755 = scalar_select %p754, %s28, 1
        %p756 = scmp.lt.s32.totalorder %s753, 0
        %s757 = scalar_select %p756, %s753, 0
        %s758 = smul.addr %s755, 2
        %s759 = sadd.s32 %s757, %s758
        %s760 = smul.addr %s759, 8
        %s761 = scalar_lea.vmem %s5, %s760
        // Predicated region
        $region57: #{tpu_custom_call.1} parent=31 // pred_check
          %p762 = pneg %p148
        $region58: #{tpu_custom_call.1} parent=31 // pred_check_branch
          %764 = sbr.rel (%p762) target = $region60
        $region59: #{tpu_custom_call.1} parent=31 // pred_region
          %s765 = sld [smem:[#allocation6 + %s29]]
        $region60: #{tpu_custom_call.1} parent=31 // pred_fallthru
          _
      $region32: #{tpu_custom_call.1} parent=5 // pred_fallthru
        _
      %p766 = scmp.le.s32.totalorder 2, %s19
      // Predicated region
      $region61: #{tpu_custom_call.1} parent=5 // pred_check
        %p767 = pneg %p766
      $region62: #{tpu_custom_call.1} parent=5 // pred_check_branch
        %769 = sbr.rel (%p767) target = $region64
      $region63: #{tpu_custom_call.1} parent=5 // pred_region
        %s770 = ssub.s32 %s19, 2
        // Predicated region
        $region65: #{tpu_custom_call.1} parent=63 // pred_check
          %p771 = pneg %p154
        $region66: #{tpu_custom_call.1} parent=63 // pred_check_branch
          %773 = sbr.rel (%p771) target = $region68
        $region67: #{tpu_custom_call.1} parent=63 // pred_region
          %s774 = sld [smem:[#allocation6 + %s31]]
          %p775 = scmp.lt.s32.totalorder %s30, 1
          %s776 = scalar_select %p775, %s30, 1
          %p777 = scmp.lt.s32.totalorder %s774, 0
          %s778 = scalar_select %p777, %s774, 0
          %s779 = smul.addr %s776, 2
          %s780 = sadd.s32 %s778, %s779
          %s781 = smul.addr %s780, 8
          %s782 = scalar_lea.vmem %s5, %s781
        $region68: #{tpu_custom_call.1} parent=63 // pred_fallthru
          _
      $region64: #{tpu_custom_call.1} parent=5 // pred_fallthru
        _
    $region6: #{tpu_custom_call.1} parent=1 // loop_footer
      %s23 = sadd.s32 1, %s19
    $region7: #{tpu_custom_call.1} parent=1 // loop_footer_branch
      %18 = sbr.rel target = $region3
    $region8: #{tpu_custom_call.1} parent=1 // loop_exit
      _
    %783 = vsyncpa [#allocation9], 1
    %s784 = scalar_lea.sflag [#allocation9], 1
    %785 = vsyncpa %s784, 1
    %786 = vsyncpa [#allocation11], 1
    %s787 = scalar_lea.sflag [#allocation11], 1
    %788 = vsyncpa %s787, 1

</llo_original>
